<compile_context>
chip_gen: v5e
topology: v5e:2x2
jax: 0.10.0
libtpu: 0.0.40
codegen_flags: <defaults>
</compile_context>

<pallas_src>
import jax
import jax.numpy as jnp
from jax.experimental import pallas as pl
from jax.experimental.pallas import tpu as pltpu

_LANE = 128
_LN2 = 0.6931471805599453


def _eanaf_math_f32(xf):
    # exp(x)/(exp(x)+2) == sigmoid(x - ln2) == 0.5*(1 + tanh((x - ln2)/2))
    gate = 0.5 * jnp.tanh(0.5 * (xf - _LN2)) + 0.5
    return xf * gate


def _eanaf_kernel(x_ref, o_ref):
    x = x_ref[...].astype(jnp.float32)
    o_ref[...] = _eanaf_math_f32(x).astype(o_ref.dtype)


def _eanaf_jnp(x):
    # Tiny-tail / tiny-input fallback (same formula => bit-consistent with kernel).
    return _eanaf_math_f32(x.astype(jnp.float32)).astype(x.dtype)


def _eanaf_2d(x2d, target_block_bytes):
    """Pallas kernel over a lane-dense (rows, 128) slab."""
    rows, lane = x2d.shape
    dtype = x2d.dtype
    itemsize = jnp.dtype(dtype).itemsize
    # minimum sublane multiple for legal (non-full-extent) block shapes
    sub = {4: 8, 2: 16, 1: 32}.get(itemsize, 8)

    # Byte-based block cap (~4 MiB): amortizes per-grid-step overhead equally
    # across dtypes.  f32 -> 8192 rows, bf16 -> 16384, int8 -> 32768.
    cap_rows = max(sub, (target_block_bytes // (lane * itemsize)) // sub * sub)
    # Clamp to ~half the rows so the grid has >= 2 steps when possible
    # (feeds both TensorCores on v7x via the "parallel" grid axis).
    half_rows = pl.cdiv(pl.cdiv(rows, 2), sub) * sub
    tr = max(sub, min(cap_rows, half_rows))
    if tr >= rows:
        tr = rows  # single full-extent block (always a legal block shape)
    else:
        steps = pl.cdiv(rows, tr)
        if steps > 1 and steps % 2 == 1:
            # Odd small grids leave one v7x TensorCore idle for a whole step;
            # try shrinking the block to the next size giving an even count.
            tr_even = pl.cdiv(pl.cdiv(rows, steps + 1), sub) * sub
            if tr_even >= sub and pl.cdiv(rows, tr_even) % 2 == 0:
                tr = tr_even

    grid = (pl.cdiv(rows, tr),)  # partial last block is masked by Pallas

    n = rows * lane
    cost = pl.CostEstimate(
        flops=5 * n,
        transcendentals=n,
        bytes_accessed=2 * n * itemsize,
    )

    return pl.pallas_call(
        _eanaf_kernel,
        out_shape=jax.ShapeDtypeStruct((rows, lane), dtype),
        grid_spec=pltpu.PrefetchScalarGridSpec(
            num_scalar_prefetch=0,
            grid=grid,
            in_specs=[pl.BlockSpec((tr, lane), lambda i: (i, 0))],
            out_specs=pl.BlockSpec((tr, lane), lambda i: (i, 0)),
        ),
        compiler_params=pltpu.CompilerParams(
            dimension_semantics=("parallel",),
            vmem_limit_bytes=32 << 20,
        ),
        cost_estimate=cost,
    )(x2d)


def eanaf(x, *, target_block_bytes=4 << 20):
    """EANAF via a Pallas TPU kernel. Any shape/dtype; shape & dtype preserved."""
    orig_shape = x.shape
    n = x.size
    if n == 0:
        return x

    flat = jnp.ravel(x)  # bitcast/view for contiguous inputs
    n_main = (n // _LANE) * _LANE

    if n_main == 0:
        # <128 elements: a kernel launch is pure overhead
        return _eanaf_jnp(flat).reshape(orig_shape)

    if n_main == n:
        # 128-aligned fast path: zero extra copies
        rows = n // _LANE
        out2d = _eanaf_2d(flat.reshape(rows, _LANE), target_block_bytes)
        return out2d.reshape(orig_shape)

    # Unaligned: kernel on the 128-aligned prefix, jnp on the <=127-element tail.
    rows = n_main // _LANE
    out_main = _eanaf_2d(flat[:n_main].reshape(rows, _LANE), target_block_bytes)
    out_tail = _eanaf_jnp(flat[n_main:])
    return jnp.concatenate([out_main.reshape(-1), out_tail]).reshape(orig_shape)


def _reference(x):
    # Naive PyTorch-spec formula (reference for finite-range inputs).
    xf = x.astype(jnp.float32)
    e = jnp.exp(xf)
    return (xf * (e / (e + 2.0))).astype(x.dtype)


if __name__ == "__main__":
    key = jax.random.PRNGKey(0)

    # Main case: 128-aligned (2*4*16*16 = 2048 elements -> 16 rows, 2 grid steps)
    x = jax.random.normal(key, (2, 4, 16, 16), dtype=jnp.float32)
    y = jax.block_until_ready(eanaf(x))
    assert y.shape == x.shape and y.dtype == x.dtype
    assert jnp.allclose(y, _reference(x), atol=1e-5, rtol=1e-5)

    # Tiny unaligned case (<128 elements): pure-jnp path
    x2 = jax.random.normal(jax.random.PRNGKey(1), (3, 5, 7), dtype=jnp.float32)
    y2 = jax.block_until_ready(eanaf(x2))
    assert y2.shape == x2.shape and y2.dtype == x2.dtype
    assert jnp.allclose(y2, _reference(x2), atol=1e-5, rtol=1e-5)

    # Unaligned prefix+tail split path (5*257 = 1285 -> 1280 kernel + 5 tail)
    x3 = jax.random.normal(jax.random.PRNGKey(2), (5, 257), dtype=jnp.float32)
    y3 = jax.block_until_ready(eanaf(x3))
    assert y3.shape == x3.shape and y3.dtype == x3.dtype
    assert jnp.allclose(y3, _reference(x3), atol=1e-5, rtol=1e-5)

    print("KERNEL_OK")
</pallas_src>

<mosaic_0001>
module attributes {stable_mosaic.version = 11 : i64} {
  func.func @_eanaf_kernel(%arg0: i32, %arg1: memref<8x128xf32, #tpu.memory_space<vmem>>, %arg2: memref<8x128xf32, #tpu.memory_space<vmem>>) attributes {dimension_semantics = [#tpu.dimension_semantics<parallel>], iteration_bounds = array<i64: 2>, scalar_prefetch = 0 : i64, scratch_operands = 0 : i64, tpu.core_type = #tpu.core_type<tc>, window_params = [{transform_indices = @transform_0, window_bounds = array<i64: 8, 128>}, {transform_indices = @transform_1, window_bounds = array<i64: 8, 128>}]} {
    %c0 = arith.constant 0 : index
    %c0_0 = arith.constant 0 : index
    %0 = vector.load %arg1[%c0, %c0_0] : memref<8x128xf32, #tpu.memory_space<vmem>>, vector<8x128xf32>
    %cst = arith.constant 0.693147182 : f32
    %1 = vector.broadcast %cst : f32 to vector<8x128xf32>
    %2 = arith.subf %0, %1 : vector<8x128xf32>
    %cst_1 = arith.constant 5.000000e-01 : f32
    %3 = vector.broadcast %cst_1 : f32 to vector<8x128xf32>
    %4 = arith.mulf %3, %2 : vector<8x128xf32>
    %5 = math.tanh %4 : vector<8x128xf32>
    %cst_2 = arith.constant 5.000000e-01 : f32
    %6 = vector.broadcast %cst_2 : f32 to vector<8x128xf32>
    %7 = arith.mulf %6, %5 : vector<8x128xf32>
    %cst_3 = arith.constant 5.000000e-01 : f32
    %8 = vector.broadcast %cst_3 : f32 to vector<8x128xf32>
    %9 = arith.addf %7, %8 : vector<8x128xf32>
    %10 = arith.mulf %0, %9 : vector<8x128xf32>
    %c0_4 = arith.constant 0 : index
    %c0_5 = arith.constant 0 : index
    %11 = vector.load %arg2[%c0_4, %c0_5] : memref<8x128xf32, #tpu.memory_space<vmem>>, vector<8x128xf32>
    tpu.vector_store %arg2[%c0_4, %c0_5], %10 {strides = array<i32>} : memref<8x128xf32, #tpu.memory_space<vmem>>, vector<8x128xf32>,
    return
  }
  func.func @transform_0(%arg0: i32) -> (i32, i32) {
    %c0_i32 = arith.constant 0 : i32
    %c0_i32_0 = arith.constant 0 : i32
    return %arg0, %c0_i32 : i32, i32
  }
  func.func @transform_1(%arg0: i32) -> (i32, i32) {
    %c0_i32 = arith.constant 0 : i32
    %c0_i32_0 = arith.constant 0 : i32
    return %arg0, %c0_i32 : i32, i32
  }
}

</mosaic_0001>

<llo_original>
// kernel: tpu_custom_call.1
$region0: #{tpu_custom_call.1}
  #allocation0 [shape = 'u32[]', space=smem, size = 0x4, offset = 0x4, fixed_abs, tag = 'smem constant byte address 0x4 - core index']
  #allocation1 [shape = 'u32[72,128]{1,0:T(1,128)}', space=vmem, size = 0x9000, scoped, tag = 'internal scratch']
  %s0 = inlined_call_operand.hbm [shape: f32[16,128], index: 0, kind: input, shape index: {}]
  %s1 = inlined_call_operand.hbm [shape: f32[16,128], index: 1, kind: output, shape index: {}]
  %s2 = sld [smem:[#allocation0]]
  $region41: #{tpu_custom_call.1} parent=0
    _
  %s4 = ssub.s32 1, %s2
  %s5 = scalar_select 0, %s4, %s2
  $region1: #{tpu_custom_call.1} parent=0
    #allocation2 [shape = 'u8[8192]{0}', space=vmem, size = 0x2000, scoped, tag = 'input window, operand 0']
    #allocation3 [shape = 's32[2]{0}', space=sflag, size = 0x8, scoped, tag = 'scoped memory for tpu_custom_call.1']
    #allocation4 [shape = 's32[2]{0}', space=sflag, size = 0x8, scoped, tag = 'scoped memory for tpu_custom_call.1']
    #allocation5 [shape = 'u8[8192]{0}', space=vmem, size = 0x2000, scoped, tag = 'output window, operand 0']
    %6 = vsyncpa [#allocation3], 0
    %s7 = scalar_lea.sflag [#allocation3], 1
    %8 = vsyncpa %s7, 0
    %9 = vsyncpa [#allocation4], 0
    %s10 = scalar_lea.sflag [#allocation4], 1
    %11 = vsyncpa %s10, 0
    loop: start=0, step=1, limit=4
    $region2: #{tpu_custom_call.1} parent=1 // loop_pre_header
      _
    $region3: #{tpu_custom_call.1} parent=1 // loop_header
      %s13 = sphi 0, %s17
      %p14 = scmp.ge.s32.totalorder %s13, 4
      %s23 = sphi 0, %s25
      %s26 = sphi 0, %s23
      %s27 = sphi 0, %s26
      %s43 = sphi 0, %s27
      %s49 = sphi 0, %s51
      %s52 = sphi 0, %s49
      %s53 = sphi 0, %s52
      %s69 = sphi 0, %s53
    $region4: #{tpu_custom_call.1} parent=1 // loop_header_branch
      %16 = sbr.rel (%p14) target = $region8
    $region5: #{tpu_custom_call.1} parent=1 // loop_body
      %s18 = ssub.s32 %s13, 1
      %s19 = ssub.s32 %s13, 2
      %s20 = sadd.s32 %s13, 1
      %s21 = ssub.s32 %s13, %s20
      %p22 = scmp.eq.s32.totalorder %s21, 0
      %s24 = sadd.s32 %s23, 1
      %s25 = scalar_select %p22, %s23, %s24
      %p28 = pneg %p22
      %p29 = scmp.eq.s32.totalorder %s13, 1
      %p30 = por %p28, %p29
      %p31 = scmp.ne.s32.totalorder %s23, %s26
      %p32 = scmp.eq.s32.totalorder %s13, 0
      %p33 = por %p31, %p32
      %p34 = scmp.ne.s32.totalorder %s23, %s26
      %p35 = scmp.eq.s32.totalorder %s18, 1
      %p36 = por %p34, %p35
      %p37 = scmp.ne.s32.totalorder %s26, %s27
      %p38 = scmp.eq.s32.totalorder %s18, 0
      %p39 = por %p37, %p38
      %p40 = scmp.ne.s32.totalorder %s26, %s27
      %p41 = scmp.eq.s32.totalorder %s19, 1
      %p42 = por %p40, %p41
      %p44 = scmp.ne.s32.totalorder %s27, %s43
      %p45 = scmp.eq.s32.totalorder %s19, 0
      %p46 = por %p44, %p45
      %s47 = ssub.s32 %s13, %s20
      %p48 = scmp.eq.s32.totalorder %s47, 0
      %s50 = sadd.s32 %s49, 1
      %s51 = scalar_select %p48, %s49, %s50
      %p54 = pneg %p48
      %p55 = scmp.eq.s32.totalorder %s13, 1
      %p56 = por %p54, %p55
      %p57 = scmp.ne.s32.totalorder %s49, %s52
      %p58 = scmp.eq.s32.totalorder %s13, 0
      %p59 = por %p57, %p58
      %p60 = scmp.ne.s32.totalorder %s49, %s52
      %p61 = scmp.eq.s32.totalorder %s18, 1
      %p62 = por %p60, %p61
      %p63 = scmp.ne.s32.totalorder %s52, %s53
      %p64 = scmp.eq.s32.totalorder %s18, 0
      %p65 = por %p63, %p64
      %p66 = scmp.ne.s32.totalorder %s52, %s53
      %p67 = scmp.eq.s32.totalorder %s19, 1
      %p68 = por %p66, %p67
      %p70 = scmp.ne.s32.totalorder %s53, %s69
      %p71 = scmp.eq.s32.totalorder %s19, 0
      %p72 = por %p70, %p71
      %p73 = scmp.le.s32.totalorder 1, %s13
      %p74 = scmp.lt.s32.totalorder %s13, 3
      %p75 = pnand %p73, %p74
      %p76 = pneg %p75
      // Predicated region
      $region9: #{tpu_custom_call.1} parent=5 // pred_check
        _
      $region10: #{tpu_custom_call.1} parent=5 // pred_check_branch
        %78 = sbr.rel (%p75) target = $region12
      $region11: #{tpu_custom_call.1} parent=5 // pred_region
        %s79 = ssub.s32 %s13, 1
      $region12: #{tpu_custom_call.1} parent=5 // pred_fallthru
        _
      %p80 = scmp.lt.s32.totalorder %s13, 2
      // Predicated region
      $region13: #{tpu_custom_call.1} parent=5 // pred_check
        %p81 = pneg %p80
      $region14: #{tpu_custom_call.1} parent=5 // pred_check_branch
        %83 = sbr.rel (%p81) target = $region16
      $region15: #{tpu_custom_call.1} parent=5 // pred_region
        // Predicated region
        $region17: #{tpu_custom_call.1} parent=15 // pred_check
          %p84 = pneg %p33
        $region18: #{tpu_custom_call.1} parent=15 // pred_check_branch
          %86 = sbr.rel (%p84) target = $region20
        $region19: #{tpu_custom_call.1} parent=15 // pred_region
          %s87 = sand.u32 %s23, 1
          %s88 = scalar_lea.sflag [#allocation3], %s87
          %s89 = sand.u32 %s23, 1
          %s90 = smul.addr %s89, 8
          %s91 = scalar_lea.vmem [#allocation2], %s90
          %93 = vsyncadd %s88, 0
          %s94 = smul.addr %s13, 8
          %s95 = scalar_lea.hbm %s0, %s94
          %s97 = sshll.u32 %s95, 4
          %s98 = int_to_ptr.hbm [resolvable:$true] %s97
          %s99 = sshll.u32 %s91, 4
          %s100 = int_to_ptr.vmem [resolvable:$true] %s99
          %102 = dma.hbm_to_vmem [thread:$0]  %s98, 128, %s100, %s88
        $region20: #{tpu_custom_call.1} parent=15 // pred_fallthru
          _
      $region16: #{tpu_custom_call.1} parent=5 // pred_fallthru
        _
      %p103 = scmp.le.s32.totalorder 1, %s13
      %p104 = scmp.lt.s32.totalorder %s13, 3
      %p105 = pnand %p103, %p104
      %p106 = pneg %p105
      // Predicated region
      $region21: #{tpu_custom_call.1} parent=5 // pred_check
        _
      $region22: #{tpu_custom_call.1} parent=5 // pred_check_branch
        %108 = sbr.rel (%p105) target = $region24
      $region23: #{tpu_custom_call.1} parent=5 // pred_region
        %s109 = ssub.s32 %s13, 1
        %s110 = sand.u32 %s26, 1
        %s111 = scalar_lea.sflag [#allocation3], %s110
        %s112 = sand.u32 %s26, 1
        %s113 = smul.addr %s112, 8
        %s114 = scalar_lea.vmem [#allocation2], %s113
        // Predicated region
        $region25: #{tpu_custom_call.1} parent=23 // pred_check
          %p115 = pneg %p39
        $region26: #{tpu_custom_call.1} parent=23 // pred_check_branch
          %117 = sbr.rel (%p115) target = $region28
        $region27: #{tpu_custom_call.1} parent=23 // pred_region
          %119 = dma.done %s111, 128
        $region28: #{tpu_custom_call.1} parent=23 // pred_fallthru
          _
        %s120 = sand.u32 %s26, 1
        %s121 = scalar_lea.sflag [#allocation3], %s120
        %s122 = sand.u32 %s26, 1
        %s123 = smul.addr %s122, 8
        %s124 = scalar_lea.vmem [#allocation2], %s123
        %p125 = pneg %p39
        %p126 = pneg %p36
        %p127 = pneg %p65
        %p128 = pneg %p62
        %s129 = sand.u32 %s52, 1
        %s130 = scalar_lea.sflag [#allocation4], %s129
        %s131 = sand.u32 %s52, 1
        %s132 = smul.addr %s131, 8
        %s133 = scalar_lea.vmem [#allocation5], %s132
        %v134 = vld [vmem:[%s114] sm:$0xff]
        %v135 = vsub.f32 %v134, 0.6931472
        %v136 = vmul.f32 %v135, 0.5
        %v137 = vtanh.pop %v136
        %v138 = vmul.f32 %v137, 0.5
        %v139 = vadd.f32 %v138, 0.5
        %v140 = vmul.f32 %v134, %v139
        %141 = vst [vmem:[%s133] sm:$0xff] %v140
        %s142 = sand.u32 %s52, 1
        %s143 = scalar_lea.sflag [#allocation4], %s142
        %s144 = sand.u32 %s52, 1
        %s145 = smul.addr %s144, 8
        %s146 = scalar_lea.vmem [#allocation5], %s145
        // Predicated region
        $region29: #{tpu_custom_call.1} parent=23 // pred_check
          %p147 = pneg %p62
        $region30: #{tpu_custom_call.1} parent=23 // pred_check_branch
          %149 = sbr.rel (%p147) target = $region32
        $region31: #{tpu_custom_call.1} parent=23 // pred_region
          %151 = vsyncadd %s143, 0
          %s152 = smul.addr %s18, 8
          %s153 = scalar_lea.hbm %s1, %s152
          %s155 = sshll.u32 %s146, 4
          %s156 = int_to_ptr.vmem [resolvable:$true] %s155
          %s157 = sshll.u32 %s153, 4
          %s158 = int_to_ptr.hbm [resolvable:$true] %s157
          %160 = dma.vmem_to_hbm [thread:$0]  %s156, 128, %s158, %s143
        $region32: #{tpu_custom_call.1} parent=23 // pred_fallthru
          _
      $region24: #{tpu_custom_call.1} parent=5 // pred_fallthru
        _
      %p161 = scmp.le.s32.totalorder 2, %s13
      // Predicated region
      $region33: #{tpu_custom_call.1} parent=5 // pred_check
        %p162 = pneg %p161
      $region34: #{tpu_custom_call.1} parent=5 // pred_check_branch
        %164 = sbr.rel (%p162) target = $region36
      $region35: #{tpu_custom_call.1} parent=5 // pred_region
        %s165 = ssub.s32 %s13, 2
        // Predicated region
        $region37: #{tpu_custom_call.1} parent=35 // pred_check
          %p166 = pneg %p68
        $region38: #{tpu_custom_call.1} parent=35 // pred_check_branch
          %168 = sbr.rel (%p166) target = $region40
        $region39: #{tpu_custom_call.1} parent=35 // pred_region
          %s169 = sand.u32 %s53, 1
          %s170 = scalar_lea.sflag [#allocation4], %s169
          %s171 = sand.u32 %s53, 1
          %s172 = smul.addr %s171, 8
          %s173 = scalar_lea.vmem [#allocation5], %s172
          %175 = dma.done %s170, 128
        $region40: #{tpu_custom_call.1} parent=35 // pred_fallthru
          _
      $region36: #{tpu_custom_call.1} parent=5 // pred_fallthru
        _
    $region6: #{tpu_custom_call.1} parent=1 // loop_footer
      %s17 = sadd.s32 1, %s13
    $region7: #{tpu_custom_call.1} parent=1 // loop_footer_branch
      %12 = sbr.rel target = $region3
    $region8: #{tpu_custom_call.1} parent=1 // loop_exit
      _
    %176 = vsyncpa [#allocation3], 1
    %s177 = scalar_lea.sflag [#allocation3], 1
    %178 = vsyncpa %s177, 1
    %179 = vsyncpa [#allocation4], 1
    %s180 = scalar_lea.sflag [#allocation4], 1
    %181 = vsyncpa %s180, 1

</llo_original>
